<compile_context>
chip_gen: v7x
topology: tpu7x:2x2x1
jax: 0.10.0
libtpu: 0.0.40
codegen_flags: <defaults>
</compile_context>

<pallas_src>
import functools

import jax
import jax.numpy as jnp
from jax import lax
from jax.experimental import pallas as pl
from jax.experimental.pallas import tpu as pltpu


def _round_up(x, m):
    return (x + m - 1) // m * m


def _sublane(dtype):
    # rows per vreg: f32 -> 8, bf16 -> 16, int8/fp8 -> 32
    return {4: 8, 2: 16, 1: 32}[jnp.dtype(dtype).itemsize]


def _strip_vmem_bytes(S, Wp, Cin_p, Cmid_p, Cout_p, in_b, out_b):
    """Rough live-VMEM estimate for one (batch, strip) grid step."""
    L1 = (S + 7) * Wp          # input window (strip + halo/pad rows)
    L2 = (S + 3) * Wp          # conv1 output / conv2 padded-input segment
    L3 = S * Wp                # conv2 output segment
    return (2 * Cin_p * L1 * in_b                       # double-buffered input window
            + 2 * 3 * Cmid_p * 3 * Cin_p * in_b         # w1 (x2 pipeline bufs)
            + 2 * 3 * Cout_p * 3 * Cmid_p * in_b        # w2
            + 2 * L2 * 4                                # mask
            + 2 * Cout_p * L3 * out_b                   # double-buffered output
            + 3 * Cin_p * (L2 + 2) * in_b               # conv1 kh-folded patches
            + 4 * Cmid_p * (L2 + 2) * 4                 # conv1 partials + acc
            + Cmid_p * L2 * in_b                        # intermediate (cast early)
            + 3 * Cmid_p * (L3 + 2) * in_b              # conv2 kh-folded patches
            + 4 * Cout_p * (L3 + 2) * 4)                # conv2 partials + acc


def _pick_strip_rows(H, Wp, Cin_p, Cmid_p, Cout_p, in_b, out_b,
                     max_rows, budget_bytes):
    for S in range(min(H, max_rows), 0, -1):
        if H % S:
            continue
        if _strip_vmem_bytes(S, Wp, Cin_p, Cmid_p, Cout_p, in_b, out_b) <= budget_bytes:
            return S
    return 1


def _double_conv_kernel(x_ref, w1_ref, w2_ref, m_ref, o_ref, *, Wp, S):
    # x_ref : (1, 1, Cin_p, (S+7)*Wp)  flattened zero-padded input row-strip
    # w1_ref: (3, Cmid_p, 3*Cin_p)     conv1 weights [kw, out, kh*Cin_p + in]
    # w2_ref: (3, Cout_p, 3*Cmid_p)    conv2 weights
    # m_ref : (1, 1, (S+3)*Wp)         1.0 on valid intermediate positions else 0.0
    # o_ref : (1, 1, Cout,  S*Wp)      padded-width output strip (2 junk cols/row)
    L2 = (S + 3) * Wp
    L3 = S * Wp
    Cout = o_ref.shape[2]

    xw = x_ref[0, 0]                                     # (Cin_p, L1)

    # ---- Conv1 over the conv2-padded frame ----
    # kh taps folded onto the (aligned) sublane/channel axis -> one patch matrix;
    # kw taps = 3 matmuls, combined by slicing the small (Cmid_p, .) results.
    taps1 = []
    for kh in range(3):
        b = (kh + 1) * Wp - 1
        taps1.append(xw[:, b:b + L2 + 2])
    patches1 = jnp.concatenate(taps1, axis=0)            # (3*Cin_p, L2+2)
    z = [jnp.dot(w1_ref[kw], patches1, preferred_element_type=jnp.float32)
         for kw in range(3)]                             # 3 x (Cmid_p, L2+2)
    acc1 = z[0][:, 0:L2] + z[1][:, 1:1 + L2] + z[2][:, 2:2 + L2]
    # ReLU + mask: zeroes the 2 wrapped cols/row and the conv2 pad rows, so
    # `seg` IS the zero-padded conv2 input.  Cast before it is replicated.
    seg = (jnp.maximum(acc1, 0.0) * m_ref[0]).astype(xw.dtype)   # (Cmid_p, L2)

    # ---- Conv2, same structure ----
    taps2 = [seg[:, kh * Wp:kh * Wp + L3 + 2] for kh in range(3)]
    patches2 = jnp.concatenate(taps2, axis=0)            # (3*Cmid_p, L3+2)
    y = [jnp.dot(w2_ref[kw], patches2, preferred_element_type=jnp.float32)
         for kw in range(3)]
    acc2 = y[0][:, 0:L3] + y[1][:, 1:1 + L3] + y[2][:, 2:2 + L3]

    # Dense, lane-aligned store in the padded-width frame; junk columns are
    # dropped by the wrapper.
    o_ref[0, 0] = jnp.maximum(acc2[:Cout], 0.0).astype(o_ref.dtype)


@functools.partial(jax.jit, static_argnames=("compute_dtype", "strip_rows"))
def double_conv(x_nchw, w1_pt, w2_pt, compute_dtype=jnp.float32, strip_rows=None):
    """DoubleConv forward.  x: (N,Cin,H,W); w: PyTorch OIHW conv weights."""
    N, Cin, H, W = x_nchw.shape
    Cmid = w1_pt.shape[0]
    Cout = w2_pt.shape[0]
    assert w1_pt.shape == (Cmid, Cin, 3, 3) and w2_pt.shape == (Cout, Cmid, 3, 3)
    assert W >= 2

    sub = _sublane(compute_dtype)
    Cin_p, Cmid_p, Cout_p = (_round_up(c, sub) for c in (Cin, Cmid, Cout))
    Wp = W + 2
    in_b = jnp.dtype(compute_dtype).itemsize
    out_b = jnp.dtype(x_nchw.dtype).itemsize

    # Strip sizing: keep per-step live VMEM under ~40 MiB so a single budget
    # fits v7x's 64 MiB physical VMEM (v5e/v6e's 128 MiB has extra headroom).
    if strip_rows is None:
        S = _pick_strip_rows(H, Wp, Cin_p, Cmid_p, Cout_p, in_b, out_b,
                             max_rows=64, budget_bytes=40 << 20)
    else:
        S = max(s for s in range(1, min(strip_rows, H) + 1) if H % s == 0)
    NS = H // S
    L1, L2, L3 = (S + 7) * Wp, (S + 3) * Wp, S * Wp

    x = x_nchw.astype(compute_dtype)
    w1 = w1_pt.astype(compute_dtype)
    w2 = w2_pt.astype(compute_dtype)

    # Input frame: channels padded to the sublane granularity, rows padded by
    # (3, 4), cols by (1, 1); overlapping row-strips (S + 7 rows) cut in XLA.
    x_p = jnp.pad(x, ((0, 0), (0, Cin_p - Cin), (3, 4), (1, 1)))
    x_win = jnp.stack([x_p[:, :, s * S:s * S + S + 7, :] for s in range(NS)],
                      axis=1).reshape(N, NS, Cin_p, L1)

    # Weights -> [kw, out_ch, kh*Cin_p + in_ch] so each kw slice is one matmul
    # against the kh-folded patches.
    def conv_w(w, co, co_p, ci, ci_p):
        w = jnp.transpose(w, (3, 0, 2, 1))               # (kw, out, kh, in)
        w = jnp.pad(w, ((0, 0), (0, co_p - co), (0, 0), (0, ci_p - ci)))
        return w.reshape(3, co_p, 3 * ci_p)
    w1k = conv_w(w1, Cmid, Cmid_p, Cin, Cin_p)
    w2k = conv_w(w2, Cout, Cout_p, Cmid, Cmid_p)

    # Validity mask over the padded-width intermediate frame:
    # flat Q -> (i, j) = divmod(Q, Wp); data iff 1<=i<=H and 1<=j<=W.
    q = jnp.arange((H + 3) * Wp, dtype=jnp.int32)
    i, j = q // Wp, q % Wp
    mask_full = ((i >= 1) & (i <= H) & (j >= 1) & (j <= W)).astype(jnp.float32)
    masks = jnp.stack([mask_full[s * S * Wp:s * S * Wp + L2] for s in range(NS)],
                      axis=0).reshape(NS, 1, L2)

    vmem_est = _strip_vmem_bytes(S, Wp, Cin_p, Cmid_p, Cout_p, in_b, out_b)
    vmem_limit = int(min(64 << 20, max(32 << 20, int(vmem_est * 1.5))))

    flops = 2 * N * NS * 9 * (Cmid_p * (L2 + 2) * Cin_p + Cout_p * (L3 + 2) * Cmid_p)
    bytes_accessed = (x_win.size * in_b + w1k.size * in_b + w2k.size * in_b
                      + masks.size * 4 + N * NS * Cout * L3 * out_b)

    out = pl.pallas_call(
        functools.partial(_double_conv_kernel, Wp=Wp, S=S),
        out_shape=jax.ShapeDtypeStruct((N, NS, Cout, L3), x_nchw.dtype),
        grid_spec=pltpu.PrefetchScalarGridSpec(
            num_scalar_prefetch=0,
            grid=(N, NS),
            in_specs=[
                pl.BlockSpec((1, 1, Cin_p, L1), lambda n, s: (n, s, 0, 0)),
                pl.BlockSpec((3, Cmid_p, 3 * Cin_p), lambda n, s: (0, 0, 0)),
                pl.BlockSpec((3, Cout_p, 3 * Cmid_p), lambda n, s: (0, 0, 0)),
                pl.BlockSpec((1, 1, L2), lambda n, s: (s, 0, 0)),
            ],
            out_specs=pl.BlockSpec((1, 1, Cout, L3), lambda n, s: (n, s, 0, 0)),
        ),
        compiler_params=pltpu.CompilerParams(
            dimension_semantics=("parallel", "parallel"),
            vmem_limit_bytes=vmem_limit),
        cost_estimate=pl.CostEstimate(
            flops=flops, transcendentals=0, bytes_accessed=bytes_accessed),
    )(x_win, w1k, w2k, masks)

    # (N, NS, Cout, S, Wp) -> (N, Cout, H, W); the 2 junk cols per row are
    # dropped here in XLA so the in-kernel store stays dense and unmasked.
    out = out.reshape(N, NS, Cout, S, Wp).transpose(0, 2, 1, 3, 4)
    return out.reshape(N, Cout, H, Wp)[:, :, :, :W]


def _reference(x_nchw, w1_pt, w2_pt):
    """Pure-JAX reference (NCHW lax.conv, full f32 precision)."""
    dn = lax.conv_dimension_numbers(x_nchw.shape, w1_pt.shape,
                                    ("NCHW", "OIHW", "NCHW"))
    prec = lax.Precision.HIGHEST
    h = lax.conv_general_dilated(x_nchw, w1_pt, (1, 1), ((1, 1), (1, 1)),
                                 dimension_numbers=dn, precision=prec)
    h = jnp.maximum(h, 0.0)
    h = lax.conv_general_dilated(h, w2_pt, (1, 1), ((1, 1), (1, 1)),
                                 dimension_numbers=dn, precision=prec)
    return jnp.maximum(h, 0.0)


if __name__ == "__main__":
    key = jax.random.PRNGKey(0)
    k_x, k_w1, k_w2 = jax.random.split(key, 3)

    N, Cin, H, W = 2, 4, 16, 16
    Cmid = Cout = 8

    def bf16_exact(a):
        # bf16-representable f32 inputs keep the check insensitive to which
        # MXU precision mode (f32 passes vs bf16 pass) the compiler picks.
        return a.astype(jnp.bfloat16).astype(jnp.float32)

    x = bf16_exact(jax.random.normal(k_x, (N, Cin, H, W), dtype=jnp.float32))
    w1 = bf16_exact(jax.random.normal(k_w1, (Cmid, Cin, 3, 3), jnp.float32)
                    * (2.0 / (Cin * 9)) ** 0.5)
    w2 = bf16_exact(jax.random.normal(k_w2, (Cout, Cmid, 3, 3), jnp.float32)
                    * (2.0 / (Cmid * 9)) ** 0.5)

    out = double_conv(x, w1, w2, strip_rows=8)   # 2 row-strips -> grid (2, 2)
    jax.block_until_ready(out)

    ref = _reference(x, w1, w2)
    assert out.shape == (N, Cout, H, W), out.shape
    err = float(jnp.max(jnp.abs(out - ref)))
    # Tolerance covers the worst case where the intermediate is rounded through
    # a bf16 MXU pass at default precision; with bf16-exact inputs the typical
    # error is <1e-5.
    assert jnp.allclose(out, ref, atol=2e-2, rtol=2e-2), err
    print("KERNEL_OK")
</pallas_src>

<mosaic_0001>
module attributes {stable_mosaic.version = 11 : i64} {
  func.func @_double_conv_kernel(%arg0: i32, %arg1: i32, %arg2: memref<1x1x8x270xf32, #tpu.memory_space<vmem>>, %arg3: memref<3x8x24xf32, #tpu.memory_space<vmem>>, %arg4: memref<3x8x24xf32, #tpu.memory_space<vmem>>, %arg5: memref<1x1x198xf32, #tpu.memory_space<vmem>>, %arg6: memref<1x1x8x144xf32, #tpu.memory_space<vmem>>) attributes {dimension_semantics = [#tpu.dimension_semantics<parallel>, #tpu.dimension_semantics<parallel>], iteration_bounds = array<i64: 2, 2>, scalar_prefetch = 0 : i64, scratch_operands = 0 : i64, tpu.core_type = #tpu.core_type<tc>, window_params = [{transform_indices = @transform_0, window_bounds = array<i64: 1, 1, 8, 270>}, {pipeline_mode = #tpu.pipeline_mode<synchronous>, transform_indices = @transform_1, window_bounds = array<i64: 3, 8, 24>}, {pipeline_mode = #tpu.pipeline_mode<synchronous>, transform_indices = @transform_2, window_bounds = array<i64: 3, 8, 24>}, {transform_indices = @transform_3, window_bounds = array<i64: 1, 1, 198>}, {transform_indices = @transform_4, window_bounds = array<i64: 1, 1, 8, 144>}]} {
    %c0 = arith.constant 0 : index
    %c0_0 = arith.constant 0 : index
    %c0_1 = arith.constant 0 : index
    %c0_2 = arith.constant 0 : index
    %0 = vector.load %arg2[%c0, %c0_0, %c0_1, %c0_2] : memref<1x1x8x270xf32, #tpu.memory_space<vmem>>, vector<1x1x8x270xf32>
    %1 = vector.shape_cast %0 : vector<1x1x8x270xf32> to vector<8x270xf32>
    %2 = vector.extract_strided_slice %1 {offsets = [0, 17], sizes = [8, 200], strides = [1, 1]} : vector<8x270xf32> to vector<8x200xf32>
    %3 = vector.extract_strided_slice %1 {offsets = [0, 35], sizes = [8, 200], strides = [1, 1]} : vector<8x270xf32> to vector<8x200xf32>
    %4 = vector.extract_strided_slice %1 {offsets = [0, 53], sizes = [8, 200], strides = [1, 1]} : vector<8x270xf32> to vector<8x200xf32>
    %5 = tpu.concatenate %2, %3, %4 in 0 : vector<8x200xf32>, vector<8x200xf32>, vector<8x200xf32> -> vector<24x200xf32>
    %c0_3 = arith.constant 0 : index
    %c0_4 = arith.constant 0 : index
    %c0_5 = arith.constant 0 : index
    %6 = vector.load %arg3[%c0_3, %c0_4, %c0_5] : memref<3x8x24xf32, #tpu.memory_space<vmem>>, vector<1x8x24xf32>
    %7 = vector.shape_cast %6 : vector<1x8x24xf32> to vector<8x24xf32>
    %cst = arith.constant dense<0.000000e+00> : vector<8x200xf32>
    %8 = tpu.matmul %7, %5, %cst {dimension_numbers = #tpu.dot_dimension_numbers<[1], [0], [0], [1], [0, 0, 1, 1], [], []>} : vector<8x24xf32>, vector<24x200xf32>, vector<8x200xf32> -> vector<8x200xf32>
    %c1 = arith.constant 1 : index
    %c0_6 = arith.constant 0 : index
    %c0_7 = arith.constant 0 : index
    %9 = vector.load %arg3[%c1, %c0_6, %c0_7] : memref<3x8x24xf32, #tpu.memory_space<vmem>>, vector<1x8x24xf32>
    %10 = vector.shape_cast %9 : vector<1x8x24xf32> to vector<8x24xf32>
    %cst_8 = arith.constant dense<0.000000e+00> : vector<8x200xf32>
    %11 = tpu.matmul %10, %5, %cst_8 {dimension_numbers = #tpu.dot_dimension_numbers<[1], [0], [0], [1], [0, 0, 1, 1], [], []>} : vector<8x24xf32>, vector<24x200xf32>, vector<8x200xf32> -> vector<8x200xf32>
    %c2 = arith.constant 2 : index
    %c0_9 = arith.constant 0 : index
    %c0_10 = arith.constant 0 : index
    %12 = vector.load %arg3[%c2, %c0_9, %c0_10] : memref<3x8x24xf32, #tpu.memory_space<vmem>>, vector<1x8x24xf32>
    %13 = vector.shape_cast %12 : vector<1x8x24xf32> to vector<8x24xf32>
    %cst_11 = arith.constant dense<0.000000e+00> : vector<8x200xf32>
    %14 = tpu.matmul %13, %5, %cst_11 {dimension_numbers = #tpu.dot_dimension_numbers<[1], [0], [0], [1], [0, 0, 1, 1], [], []>} : vector<8x24xf32>, vector<24x200xf32>, vector<8x200xf32> -> vector<8x200xf32>
    %15 = vector.extract_strided_slice %8 {offsets = [0, 0], sizes = [8, 198], strides = [1, 1]} : vector<8x200xf32> to vector<8x198xf32>
    %16 = vector.extract_strided_slice %11 {offsets = [0, 1], sizes = [8, 198], strides = [1, 1]} : vector<8x200xf32> to vector<8x198xf32>
    %17 = arith.addf %15, %16 : vector<8x198xf32>
    %18 = vector.extract_strided_slice %14 {offsets = [0, 2], sizes = [8, 198], strides = [1, 1]} : vector<8x200xf32> to vector<8x198xf32>
    %19 = arith.addf %17, %18 : vector<8x198xf32>
    %cst_12 = arith.constant 0.000000e+00 : f32
    %20 = vector.broadcast %cst_12 : f32 to vector<8x198xf32>
    %21 = arith.maximumf %19, %20 : vector<8x198xf32>
    %c0_13 = arith.constant 0 : index
    %c0_14 = arith.constant 0 : index
    %c0_15 = arith.constant 0 : index
    %22 = vector.load %arg5[%c0_13, %c0_14, %c0_15] : memref<1x1x198xf32, #tpu.memory_space<vmem>>, vector<1x1x198xf32>
    %23 = vector.shape_cast %22 : vector<1x1x198xf32> to vector<1x198xf32>
    %24 = vector.broadcast %23 : vector<1x198xf32> to vector<8x198xf32>
    %25 = arith.mulf %21, %24 : vector<8x198xf32>
    %26 = vector.extract_strided_slice %25 {offsets = [0, 0], sizes = [8, 146], strides = [1, 1]} : vector<8x198xf32> to vector<8x146xf32>
    %27 = vector.extract_strided_slice %25 {offsets = [0, 18], sizes = [8, 146], strides = [1, 1]} : vector<8x198xf32> to vector<8x146xf32>
    %28 = vector.extract_strided_slice %25 {offsets = [0, 36], sizes = [8, 146], strides = [1, 1]} : vector<8x198xf32> to vector<8x146xf32>
    %29 = tpu.concatenate %26, %27, %28 in 0 : vector<8x146xf32>, vector<8x146xf32>, vector<8x146xf32> -> vector<24x146xf32>
    %c0_16 = arith.constant 0 : index
    %c0_17 = arith.constant 0 : index
    %c0_18 = arith.constant 0 : index
    %30 = vector.load %arg4[%c0_16, %c0_17, %c0_18] : memref<3x8x24xf32, #tpu.memory_space<vmem>>, vector<1x8x24xf32>
    %31 = vector.shape_cast %30 : vector<1x8x24xf32> to vector<8x24xf32>
    %cst_19 = arith.constant dense<0.000000e+00> : vector<8x146xf32>
    %32 = tpu.matmul %31, %29, %cst_19 {dimension_numbers = #tpu.dot_dimension_numbers<[1], [0], [0], [1], [0, 0, 1, 1], [], []>} : vector<8x24xf32>, vector<24x146xf32>, vector<8x146xf32> -> vector<8x146xf32>
    %c1_20 = arith.constant 1 : index
    %c0_21 = arith.constant 0 : index
    %c0_22 = arith.constant 0 : index
    %33 = vector.load %arg4[%c1_20, %c0_21, %c0_22] : memref<3x8x24xf32, #tpu.memory_space<vmem>>, vector<1x8x24xf32>
    %34 = vector.shape_cast %33 : vector<1x8x24xf32> to vector<8x24xf32>
    %cst_23 = arith.constant dense<0.000000e+00> : vector<8x146xf32>
    %35 = tpu.matmul %34, %29, %cst_23 {dimension_numbers = #tpu.dot_dimension_numbers<[1], [0], [0], [1], [0, 0, 1, 1], [], []>} : vector<8x24xf32>, vector<24x146xf32>, vector<8x146xf32> -> vector<8x146xf32>
    %c2_24 = arith.constant 2 : index
    %c0_25 = arith.constant 0 : index
    %c0_26 = arith.constant 0 : index
    %36 = vector.load %arg4[%c2_24, %c0_25, %c0_26] : memref<3x8x24xf32, #tpu.memory_space<vmem>>, vector<1x8x24xf32>
    %37 = vector.shape_cast %36 : vector<1x8x24xf32> to vector<8x24xf32>
    %cst_27 = arith.constant dense<0.000000e+00> : vector<8x146xf32>
    %38 = tpu.matmul %37, %29, %cst_27 {dimension_numbers = #tpu.dot_dimension_numbers<[1], [0], [0], [1], [0, 0, 1, 1], [], []>} : vector<8x24xf32>, vector<24x146xf32>, vector<8x146xf32> -> vector<8x146xf32>
    %39 = vector.extract_strided_slice %32 {offsets = [0, 0], sizes = [8, 144], strides = [1, 1]} : vector<8x146xf32> to vector<8x144xf32>
    %40 = vector.extract_strided_slice %35 {offsets = [0, 1], sizes = [8, 144], strides = [1, 1]} : vector<8x146xf32> to vector<8x144xf32>
    %41 = arith.addf %39, %40 : vector<8x144xf32>
    %42 = vector.extract_strided_slice %38 {offsets = [0, 2], sizes = [8, 144], strides = [1, 1]} : vector<8x146xf32> to vector<8x144xf32>
    %43 = arith.addf %41, %42 : vector<8x144xf32>
    %cst_28 = arith.constant 0.000000e+00 : f32
    %44 = vector.broadcast %cst_28 : f32 to vector<8x144xf32>
    %45 = arith.maximumf %43, %44 : vector<8x144xf32>
    %c0_29 = arith.constant 0 : index
    %c0_30 = arith.constant 0 : index
    %c0_31 = arith.constant 0 : index
    %c0_32 = arith.constant 0 : index
    %46 = vector.load %arg6[%c0_29, %c0_30, %c0_31, %c0_32] : memref<1x1x8x144xf32, #tpu.memory_space<vmem>>, vector<1x1x8x144xf32>
    %47 = vector.shape_cast %46 : vector<1x1x8x144xf32> to vector<8x144xf32>
    %48 = vector.shape_cast %45 : vector<8x144xf32> to vector<1x1x8x144xf32>
    tpu.vector_store %arg6[%c0_29, %c0_30, %c0_31, %c0_32], %48 {strides = array<i32>} : memref<1x1x8x144xf32, #tpu.memory_space<vmem>>, vector<1x1x8x144xf32>,
    return
  }
  func.func @transform_0(%arg0: i32, %arg1: i32) -> (i32, i32, i32, i32) {
    %c0_i32 = arith.constant 0 : i32
    %c0_i32_0 = arith.constant 0 : i32
    %c0_i32_1 = arith.constant 0 : i32
    return %arg0, %arg1, %c0_i32, %c0_i32_0 : i32, i32, i32, i32
  }
  func.func @transform_1(%arg0: i32, %arg1: i32) -> (i32, i32, i32) {
    %c0_i32 = arith.constant 0 : i32
    %c0_i32_0 = arith.constant 0 : i32
    %c0_i32_1 = arith.constant 0 : i32
    %c0_i32_2 = arith.constant 0 : i32
    return %c0_i32, %c0_i32_0, %c0_i32_1 : i32, i32, i32
  }
  func.func @transform_2(%arg0: i32, %arg1: i32) -> (i32, i32, i32) {
    %c0_i32 = arith.constant 0 : i32
    %c0_i32_0 = arith.constant 0 : i32
    %c0_i32_1 = arith.constant 0 : i32
    %c0_i32_2 = arith.constant 0 : i32
    return %c0_i32, %c0_i32_0, %c0_i32_1 : i32, i32, i32
  }
  func.func @transform_3(%arg0: i32, %arg1: i32) -> (i32, i32, i32) {
    %c0_i32 = arith.constant 0 : i32
    %c0_i32_0 = arith.constant 0 : i32
    %c0_i32_1 = arith.constant 0 : i32
    return %arg1, %c0_i32, %c0_i32_0 : i32, i32, i32
  }
  func.func @transform_4(%arg0: i32, %arg1: i32) -> (i32, i32, i32, i32) {
    %c0_i32 = arith.constant 0 : i32
    %c0_i32_0 = arith.constant 0 : i32
    %c0_i32_1 = arith.constant 0 : i32
    return %arg0, %arg1, %c0_i32, %c0_i32_0 : i32, i32, i32, i32
  }
}

</mosaic_0001>

<llo_original>
// kernel: double_conv.1
$region0: #{double_conv.1}
  #allocation0 [shape = 'u32[]', space=smem, size = 0x4, offset = 0x4, fixed_abs, tag = 'smem constant byte address 0x4 - core index']
  #allocation1 [shape = 'u32[144,128]{1,0:T(1,128)}', space=vmem, size = 0x12000, scoped, tag = 'internal scratch']
  %s0 = inlined_call_operand.vmem [shape: f32[2,2,8,270], index: 0, kind: input, shape index: {}]
  %s1 = inlined_call_operand.vmem [shape: f32[3,8,24], index: 1, kind: input, shape index: {}]
  %s2 = inlined_call_operand.vmem [shape: f32[3,8,24], index: 2, kind: input, shape index: {}]
  %s3 = inlined_call_operand.vmem [shape: f32[2,1,198], index: 3, kind: input, shape index: {}]
  %s4 = inlined_call_operand.vmem [shape: f32[2,2,8,144], index: 4, kind: output, shape index: {}]
  %s5 = sld [smem:[#allocation0]]
  $region49: #{double_conv.1} parent=0
    _
  %s7 = ssub.s32 1, %s5
  %s8 = scalar_select 0, %s7, %s5
  loop: start=0, step=1, limit=6
  $region2: #{double_conv.1} parent=0 // loop_pre_header
    _
  $region3: #{double_conv.1} parent=0 // loop_header
    %s10 = sphi 0, %s14
    %p11 = scmp.ge.s32.totalorder %s10, 6
    %s17 = sphi 0, %s29
    %s18 = sphi 0, %s25
    %s19 = sphi 0, %s17
    %s20 = sphi 0, %s18
    %s21 = sphi 0, %s19
    %s22 = sphi 0, %s20
    %s34 = sphi 0, %s36
    %s37 = sphi 0, %s34
    %s38 = sphi 0, %s37
    %s54 = sphi 0, %s38
    %s58 = sphi 0, %s58
    %s60 = sphi 0, %s58
    %s61 = sphi 0, %s60
    %s75 = sphi 0, %s61
    %s79 = sphi 0, %s79
    %s81 = sphi 0, %s79
    %s82 = sphi 0, %s81
    %s96 = sphi 0, %s82
    %s102 = sphi 0, %s104
    %s105 = sphi 0, %s102
    %s106 = sphi 0, %s105
    %s122 = sphi 0, %s106
    %s130 = sphi 0, %s132
    %s133 = sphi 0, %s130
    %s134 = sphi 0, %s133
    %s150 = sphi 0, %s134
  $region4: #{double_conv.1} parent=0 // loop_header_branch
    %13 = sbr.rel (%p11) target = $region8
  $region5: #{double_conv.1} parent=0 // loop_body
    %s15 = ssub.s32 %s10, 1
    %s16 = ssub.s32 %s10, 2
    %s23 = sadd.s32 1, %s18
    %p24 = scmp.ge.s32.totalorder %s23, 2
    %s25 = scalar_select %p24, 0, %s23
    %s26 = sadd.s32 1, %s17
    %s27 = scalar_select %p24, %s26, %s17
    %p28 = scmp.ge.s32.totalorder %s27, 2
    %s29 = scalar_select %p28, 0, %s27
    %s30 = ssub.s32 %s17, %s29
    %s31 = ssub.s32 %s18, %s25
    %s32 = sor.u32 %s30, %s31
    %p33 = scmp.eq.s32.totalorder %s32, 0
    %s35 = sadd.s32 %s34, 1
    %s36 = scalar_select %p33, %s34, %s35
    %p39 = pneg %p33
    %p40 = scmp.eq.s32.totalorder %s10, 3
    %p41 = por %p39, %p40
    %p42 = scmp.ne.s32.totalorder %s34, %s37
    %p43 = scmp.eq.s32.totalorder %s10, 0
    %p44 = por %p42, %p43
    %p45 = scmp.ne.s32.totalorder %s34, %s37
    %p46 = scmp.eq.s32.totalorder %s15, 3
    %p47 = por %p45, %p46
    %p48 = scmp.ne.s32.totalorder %s37, %s38
    %p49 = scmp.eq.s32.totalorder %s15, 0
    %p50 = por %p48, %p49
    %p51 = scmp.ne.s32.totalorder %s37, %s38
    %p52 = scmp.eq.s32.totalorder %s16, 3
    %p53 = por %p51, %p52
    %p55 = scmp.ne.s32.totalorder %s38, %s54
    %p56 = scmp.eq.s32.totalorder %s16, 0
    %p57 = por %p55, %p56
    %s59 = sadd.s32 %s58, 1
    %p62 = scmp.eq.s32.totalorder %s10, 3
    %p63 = scmp.ne.s32.totalorder %s58, %s60
    %p64 = scmp.eq.s32.totalorder %s10, 0
    %p65 = por %p63, %p64
    %p66 = scmp.ne.s32.totalorder %s58, %s60
    %p67 = scmp.eq.s32.totalorder %s15, 3
    %p68 = por %p66, %p67
    %p69 = scmp.ne.s32.totalorder %s60, %s61
    %p70 = scmp.eq.s32.totalorder %s15, 0
    %p71 = por %p69, %p70
    %p72 = scmp.ne.s32.totalorder %s60, %s61
    %p73 = scmp.eq.s32.totalorder %s16, 3
    %p74 = por %p72, %p73
    %p76 = scmp.ne.s32.totalorder %s61, %s75
    %p77 = scmp.eq.s32.totalorder %s16, 0
    %p78 = por %p76, %p77
    %s80 = sadd.s32 %s79, 1
    %p83 = scmp.eq.s32.totalorder %s10, 3
    %p84 = scmp.ne.s32.totalorder %s79, %s81
    %p85 = scmp.eq.s32.totalorder %s10, 0
    %p86 = por %p84, %p85
    %p87 = scmp.ne.s32.totalorder %s79, %s81
    %p88 = scmp.eq.s32.totalorder %s15, 3
    %p89 = por %p87, %p88
    %p90 = scmp.ne.s32.totalorder %s81, %s82
    %p91 = scmp.eq.s32.totalorder %s15, 0
    %p92 = por %p90, %p91
    %p93 = scmp.ne.s32.totalorder %s81, %s82
    %p94 = scmp.eq.s32.totalorder %s16, 3
    %p95 = por %p93, %p94
    %p97 = scmp.ne.s32.totalorder %s82, %s96
    %p98 = scmp.eq.s32.totalorder %s16, 0
    %p99 = por %p97, %p98
    %s100 = ssub.s32 %s18, %s25
    %p101 = scmp.eq.s32.totalorder %s100, 0
    %s103 = sadd.s32 %s102, 1
    %s104 = scalar_select %p101, %s102, %s103
    %p107 = pneg %p101
    %p108 = scmp.eq.s32.totalorder %s10, 3
    %p109 = por %p107, %p108
    %p110 = scmp.ne.s32.totalorder %s102, %s105
    %p111 = scmp.eq.s32.totalorder %s10, 0
    %p112 = por %p110, %p111
    %p113 = scmp.ne.s32.totalorder %s102, %s105
    %p114 = scmp.eq.s32.totalorder %s15, 3
    %p115 = por %p113, %p114
    %p116 = scmp.ne.s32.totalorder %s105, %s106
    %p117 = scmp.eq.s32.totalorder %s15, 0
    %p118 = por %p116, %p117
    %p119 = scmp.ne.s32.totalorder %s105, %s106
    %p120 = scmp.eq.s32.totalorder %s16, 3
    %p121 = por %p119, %p120
    %p123 = scmp.ne.s32.totalorder %s106, %s122
    %p124 = scmp.eq.s32.totalorder %s16, 0
    %p125 = por %p123, %p124
    %s126 = ssub.s32 %s17, %s29
    %s127 = ssub.s32 %s18, %s25
    %s128 = sor.u32 %s126, %s127
    %p129 = scmp.eq.s32.totalorder %s128, 0
    %s131 = sadd.s32 %s130, 1
    %s132 = scalar_select %p129, %s130, %s131
    %p135 = pneg %p129
    %p136 = scmp.eq.s32.totalorder %s10, 3
    %p137 = por %p135, %p136
    %p138 = scmp.ne.s32.totalorder %s130, %s133
    %p139 = scmp.eq.s32.totalorder %s10, 0
    %p140 = por %p138, %p139
    %p141 = scmp.ne.s32.totalorder %s130, %s133
    %p142 = scmp.eq.s32.totalorder %s15, 3
    %p143 = por %p141, %p142
    %p144 = scmp.ne.s32.totalorder %s133, %s134
    %p145 = scmp.eq.s32.totalorder %s15, 0
    %p146 = por %p144, %p145
    %p147 = scmp.ne.s32.totalorder %s133, %s134
    %p148 = scmp.eq.s32.totalorder %s16, 3
    %p149 = por %p147, %p148
    %p151 = scmp.ne.s32.totalorder %s134, %s150
    %p152 = scmp.eq.s32.totalorder %s16, 0
    %p153 = por %p151, %p152
    %p154 = scmp.le.s32.totalorder 1, %s10
    %p155 = scmp.lt.s32.totalorder %s10, 5
    %p156 = pnand %p154, %p155
    %p157 = pneg %p156
    // Predicated region
    $region9: #{double_conv.1} parent=5 // pred_check
      _
    $region10: #{double_conv.1} parent=5 // pred_check_branch
      %159 = sbr.rel (%p156) target = $region12
    $region11: #{double_conv.1} parent=5 // pred_region
      %s160 = ssub.s32 %s10, 1
      // Predicated region
      $region13: #{double_conv.1} parent=11 // pred_check
        %p161 = pneg %p71
      $region14: #{double_conv.1} parent=11 // pred_check_branch
        %163 = sbr.rel (%p161) target = $region16
      $region15: #{double_conv.1} parent=11 // pred_region
        _
      $region16: #{double_conv.1} parent=11 // pred_fallthru
        _
      // Predicated region
      $region17: #{double_conv.1} parent=11 // pred_check
        %p164 = pneg %p92
      $region18: #{double_conv.1} parent=11 // pred_check_branch
        %166 = sbr.rel (%p164) target = $region20
      $region19: #{double_conv.1} parent=11 // pred_region
        _
      $region20: #{double_conv.1} parent=11 // pred_fallthru
        _
    $region12: #{double_conv.1} parent=5 // pred_fallthru
      _
    %p167 = scmp.lt.s32.totalorder %s10, 4
    // Predicated region
    $region21: #{double_conv.1} parent=5 // pred_check
      %p168 = pneg %p167
    $region22: #{double_conv.1} parent=5 // pred_check_branch
      %170 = sbr.rel (%p168) target = $region24
    $region23: #{double_conv.1} parent=5 // pred_region
      // Predicated region
      $region25: #{double_conv.1} parent=23 // pred_check
        %p171 = pneg %p44
      $region26: #{double_conv.1} parent=23 // pred_check_branch
        %173 = sbr.rel (%p171) target = $region28
      $region27: #{double_conv.1} parent=23 // pred_region
        %p174 = scmp.lt.s32.totalorder %s17, 1
        %s175 = scalar_select %p174, %s17, 1
        %p176 = scmp.lt.s32.totalorder %s18, 1
        %s177 = scalar_select %p176, %s18, 1
        %s178 = smul.addr %s177, 3
        %s179 = smul.addr %s175, 6
        %s180 = sadd.s32 %s178, %s179
        %s181 = smul.addr %s180, 8
        %s182 = scalar_lea.vmem %s0, %s181
      $region28: #{double_conv.1} parent=23 // pred_fallthru
        _
      // Predicated region
      $region29: #{double_conv.1} parent=23 // pred_check
        %p183 = pneg %p112
      $region30: #{double_conv.1} parent=23 // pred_check_branch
        %185 = sbr.rel (%p183) target = $region32
      $region31: #{double_conv.1} parent=23 // pred_region
        %p186 = scmp.lt.s32.totalorder %s18, 1
        %s187 = scalar_select %p186, %s18, 1
        %s188 = smul.addr %s187, 2
        %s189 = scalar_lea.vmem %s3, %s188
      $region32: #{double_conv.1} parent=23 // pred_fallthru
        _
    $region24: #{double_conv.1} parent=5 // pred_fallthru
      _
    %p190 = scmp.le.s32.totalorder 1, %s10
    %p191 = scmp.lt.s32.totalorder %s10, 5
    %p192 = pnand %p190, %p191
    %p193 = pneg %p192
    // Predicated region
    $region33: #{double_conv.1} parent=5 // pred_check
      _
    $region34: #{double_conv.1} parent=5 // pred_check_branch
      %195 = sbr.rel (%p192) target = $region36
    $region35: #{double_conv.1} parent=5 // pred_region
      %s196 = ssub.s32 %s10, 1
      %p197 = scmp.lt.s32.totalorder %s19, 1
      %s198 = scalar_select %p197, %s19, 1
      %p199 = scmp.lt.s32.totalorder %s20, 1
      %s200 = scalar_select %p199, %s20, 1
      %s201 = smul.addr %s200, 3
      %s202 = smul.addr %s198, 6
      %s203 = sadd.s32 %s201, %s202
      %s204 = smul.addr %s203, 8
      %s205 = scalar_lea.vmem %s0, %s204
      %p206 = pneg %p50
      %p207 = pneg %p47
      %p208 = pneg %p71
      %p209 = pneg %p68
      %p210 = pneg %p92
      %p211 = pneg %p89
      %p212 = scmp.lt.s32.totalorder %s20, 1
      %s213 = scalar_select %p212, %s20, 1
      %s214 = smul.addr %s213, 2
      %s215 = scalar_lea.vmem %s3, %s214
      %p216 = pneg %p118
      %p217 = pneg %p115
      %p218 = pneg %p146
      %p219 = pneg %p143
      %p220 = scmp.lt.s32.totalorder %s19, 1
      %s221 = scalar_select %p220, %s19, 1
      %p222 = scmp.lt.s32.totalorder %s20, 1
      %s223 = scalar_select %p222, %s20, 1
      %s224 = smul.addr %s223, 2
      %s225 = smul.addr %s221, 4
      %s226 = sadd.s32 %s224, %s225
      %s227 = smul.addr %s226, 8
      %s228 = scalar_lea.vmem %s4, %s227
      %p229 = scmp.lt.s32.totalorder %s19, 1
      %s230 = scalar_select %p229, %s19, 1
      %p231 = scmp.lt.s32.totalorder %s20, 1
      %s232 = scalar_select %p231, %s20, 1
      %s233 = smul.addr %s232, 3
      %s234 = smul.addr %s230, 6
      %s235 = sadd.s32 %s233, %s234
      %s236 = smul.addr %s235, 8
      %s237 = scalar_lea.vmem %s0, %s236
      %p238 = scmp.lt.s32.totalorder %s20, 1
      %s239 = scalar_select %p238, %s20, 1
      %s240 = smul.addr %s239, 2
      %s241 = scalar_lea.vmem %s3, %s240
      %p242 = scmp.lt.s32.totalorder %s19, 1
      %s243 = scalar_select %p242, %s19, 1
      %p244 = scmp.lt.s32.totalorder %s20, 1
      %s245 = scalar_select %p244, %s20, 1
      %s246 = smul.addr %s245, 2
      %s247 = smul.addr %s243, 4
      %s248 = sadd.s32 %s246, %s247
      %s249 = smul.addr %s248, 8
      %s250 = scalar_lea.vmem %s4, %s249
      %v251 = vld [vmem:[%s237] sm:$0xff]
      %v252 = vld [vmem:[%s237 + $0x8] sm:$0xff]
      %255 = vrot.lane.b32.xlu0 %v251, 110
      %v256 = vpop.permute.xlu0 %255
      %257 = vrot.lane.b32.xlu0 %v252, 110
      %v258 = vpop.permute.xlu0 %257
      %vm259 = vcmask 900096
      %v260 = vsel %vm259, %v256, %v258
      %261 = vrot.lane.b32.xlu0 %v251, 92
      %v262 = vpop.permute.xlu0 %261
      %263 = vrot.lane.b32.xlu0 %v252, 92
      %v264 = vpop.permute.xlu0 %263
      %vm265 = vcmask 752640
      %v266 = vsel %vm265, %v262, %v264
      %v267 = vld [vmem:[%s1] sm:$0xff]
      %268 = vrot.lane.b32.xlu0 %v251, 111
      %v269 = vpop.permute.xlu0 %268
      %270 = vrot.lane.b32.xlu0 %v252, 111
      %v271 = vpop.permute.xlu0 %270
      %272 = vrot.lane.b32.xlu0 %v260, 111
      %v273 = vpop.permute.xlu0 %272
      %274 = vrot.lane.b32.xlu0 %v258, 111
      %v275 = vpop.permute.xlu0 %274
      %276 = vrot.lane.b32.xlu0 %v266, 111
      %v277 = vpop.permute.xlu0 %276
      %278 = vrot.lane.b32.xlu0 %v264, 111
      %v279 = vpop.permute.xlu0 %278
      %vm280 = vcmask 908288
      %v281 = vsel %vm280, %v269, %v271
      %v282 = vsel %vm280, %v273, %v275
      %v283 = vsel %vm280, %v277, %v279
      %vm290 = vcmask 195584
      %v292 = vsel %vm290, %v267, 0
      %294 = vmatprep.subr.mxu0 %v271
      %295 = vmatpush1.msra.mxu0 %v281
      %296 = vmatprep.subr.mxu0 %v275
      %297 = vmatpush1.msra.mxu0 %v282
      %298 = vmatprep.subr.mxu0 %v279
      %299 = vmatpush1.msra.mxu0 %v283
      %300 = vmatprep.subr.mxu0 0.0
      %301 = vmatpush1.msra.mxu0 0.0
      %302 = vmatprep.subr.mxu0 0.0
      %303 = vmatpush1.msra.mxu0 0.0
      %304 = vmatprep.subr.mxu0 0.0
      %305 = vmatpush1.msra.mxu0 0.0
      %306 = vmatprep.subr.mxu0 0.0
      %307 = vmatpush1.msra.mxu0 0.0
      %308 = vmatprep.subr.mxu0 0.0
      %309 = vmatpush1.msra.mxu0 0.0
      %310 = vmatprep.subr.mxu0 0.0
      %311 = vmatpush1.msra.mxu0 0.0
      %312 = vmatprep.subr.mxu0 0.0
      %313 = vmatpush1.msra.mxu0 0.0
      %314 = vmatprep.subr.mxu0 0.0
      %315 = vmatpush1.msra.mxu0 0.0
      %316 = vmatprep.subr.mxu0 0.0
      %317 = vmatpush1.msra.mxu0 0.0
      %318 = vmatprep.subr.mxu0 0.0
      %319 = vmatpush1.msra.mxu0 0.0
      %320 = vmatprep.subr.mxu0 0.0
      %321 = vmatpush1.msra.mxu0 0.0
      %322 = vmatprep.subr.mxu0 0.0
      %323 = vmatpush1.msra.mxu0 0.0
      %324 = vmatprep.subr.mxu0 0.0
      %325 = vmatpush1.msra.mxu0 0.0
      %326 = vmatprep.subr.mxu0 0.0
      %327 = vmatpush1.msra.mxu0 0.0
      %328 = vmatprep.subr.mxu0 0.0
      %329 = vmatpush1.msra.mxu0 0.0
      %330 = vmatprep.subr.mxu0 0.0
      %331 = vmatpush1.msra.mxu0 0.0
      %332 = vmatprep.subr.mxu0 0.0
      %333 = vmatpush1.msra.mxu0 0.0
      %334 = vmatprep.subr.mxu0 0.0
      %335 = vmatpush1.msra.mxu0 0.0
      %336 = vmatprep.subr.mxu0 0.0
      %337 = vmatpush1.msra.mxu0 0.0
      %338 = vmatprep.subr.mxu0 0.0
      %339 = vmatpush1.msra.mxu0 0.0
      %340 = vmatprep.subr.mxu0 0.0
      %341 = vmatpush1.msra.mxu0 0.0
      %342 = vmatprep.subr.mxu0 0.0
      %343 = vmatpush1.msra.mxu0 0.0
      %344 = vmatprep.subr.mxu0 0.0
      %345 = vmatpush1.msra.mxu0 0.0
      %346 = vmatprep.subr.mxu0 0.0
      %347 = vmatpush1.msra.mxu0 0.0
      %348 = vmatprep.subr.mxu0 0.0
      %349 = vmatpush1.msra.mxu0 0.0
      %350 = vmatprep.subr.mxu0 0.0
      %351 = vmatpush1.msra.mxu0 0.0
      %352 = vmatprep.subr.mxu0 0.0
      %353 = vmatpush1.msra.mxu0 0.0
      %354 = vmatprep.subr.mxu0 0.0
      %355 = vmatpush1.msra.mxu0 0.0
      %356 = vmatprep.subr.mxu0 0.0
      %357 = vmatpush1.msra.mxu0 0.0
      %358 = vmatprep.mubr.f32.mxu0 0.0
      %359 = vmatmul.mubr.f32.gmra.mrb[0].mxu0 %v292
      %v360 = vpop.f32.mrb[0].mxu0
      %v361 = vadd.f32 0.0, %v360
      %v362 = vpop.f32.mrb[0].mxu0
      %v363 = vadd.f32 0.0, %v362
      %364 = vdwg.mxu0
      %s365 = scalar_lea.vmem %s1, 8
      %v366 = vld [vmem:[%s365] sm:$0xff]
      %v368 = vsel %vm290, %v366, 0
      %370 = vmatprep.subr.mxu0 %v271
      %371 = vmatpush1.msra.mxu0 %v281
      %372 = vmatprep.subr.mxu0 %v275
      %373 = vmatpush1.msra.mxu0 %v282
      %374 = vmatprep.subr.mxu0 %v279
      %375 = vmatpush1.msra.mxu0 %v283
      %376 = vmatprep.subr.mxu0 0.0
      %377 = vmatpush1.msra.mxu0 0.0
      %378 = vmatprep.subr.mxu0 0.0
      %379 = vmatpush1.msra.mxu0 0.0
      %380 = vmatprep.subr.mxu0 0.0
      %381 = vmatpush1.msra.mxu0 0.0
      %382 = vmatprep.subr.mxu0 0.0
      %383 = vmatpush1.msra.mxu0 0.0
      %384 = vmatprep.subr.mxu0 0.0
      %385 = vmatpush1.msra.mxu0 0.0
      %386 = vmatprep.subr.mxu0 0.0
      %387 = vmatpush1.msra.mxu0 0.0
      %388 = vmatprep.subr.mxu0 0.0
      %389 = vmatpush1.msra.mxu0 0.0
      %390 = vmatprep.subr.mxu0 0.0
      %391 = vmatpush1.msra.mxu0 0.0
      %392 = vmatprep.subr.mxu0 0.0
      %393 = vmatpush1.msra.mxu0 0.0
      %394 = vmatprep.subr.mxu0 0.0
      %395 = vmatpush1.msra.mxu0 0.0
      %396 = vmatprep.subr.mxu0 0.0
      %397 = vmatpush1.msra.mxu0 0.0
      %398 = vmatprep.subr.mxu0 0.0
      %399 = vmatpush1.msra.mxu0 0.0
      %400 = vmatprep.subr.mxu0 0.0
      %401 = vmatpush1.msra.mxu0 0.0
      %402 = vmatprep.subr.mxu0 0.0
      %403 = vmatpush1.msra.mxu0 0.0
      %404 = vmatprep.subr.mxu0 0.0
      %405 = vmatpush1.msra.mxu0 0.0
      %406 = vmatprep.subr.mxu0 0.0
      %407 = vmatpush1.msra.mxu0 0.0
      %408 = vmatprep.subr.mxu0 0.0
      %409 = vmatpush1.msra.mxu0 0.0
      %410 = vmatprep.subr.mxu0 0.0
      %411 = vmatpush1.msra.mxu0 0.0
      %412 = vmatprep.subr.mxu0 0.0
      %413 = vmatpush1.msra.mxu0 0.0
      %414 = vmatprep.subr.mxu0 0.0
      %415 = vmatpush1.msra.mxu0 0.0
      %416 = vmatprep.subr.mxu0 0.0
      %417 = vmatpush1.msra.mxu0 0.0
      %418 = vmatprep.subr.mxu0 0.0
      %419 = vmatpush1.msra.mxu0 0.0
      %420 = vmatprep.subr.mxu0 0.0
      %421 = vmatpush1.msra.mxu0 0.0
      %422 = vmatprep.subr.mxu0 0.0
      %423 = vmatpush1.msra.mxu0 0.0
      %424 = vmatprep.subr.mxu0 0.0
      %425 = vmatpush1.msra.mxu0 0.0
      %426 = vmatprep.subr.mxu0 0.0
      %427 = vmatpush1.msra.mxu0 0.0
      %428 = vmatprep.subr.mxu0 0.0
      %429 = vmatpush1.msra.mxu0 0.0
      %430 = vmatprep.subr.mxu0 0.0
      %431 = vmatpush1.msra.mxu0 0.0
      %432 = vmatprep.subr.mxu0 0.0
      %433 = vmatpush1.msra.mxu0 0.0
      %434 = vmatprep.mubr.f32.mxu0 0.0
      %435 = vmatmul.mubr.f32.gmra.mrb[0].mxu0 %v368
      %v436 = vpop.f32.mrb[0].mxu0
      %v437 = vadd.f32 0.0, %v436
      %v438 = vpop.f32.mrb[0].mxu0
      %v439 = vadd.f32 0.0, %v438
      %440 = vdwg.mxu0
      %s441 = scalar_lea.vmem %s1, 16
      %v442 = vld [vmem:[%s441] sm:$0xff]
      %v444 = vsel %vm290, %v442, 0
      %446 = vmatprep.subr.mxu0 %v271
      %447 = vmatpush1.msra.mxu0 %v281
      %448 = vmatprep.subr.mxu0 %v275
      %449 = vmatpush1.msra.mxu0 %v282
      %450 = vmatprep.subr.mxu0 %v279
      %451 = vmatpush1.msra.mxu0 %v283
      %452 = vmatprep.subr.mxu0 0.0
      %453 = vmatpush1.msra.mxu0 0.0
      %454 = vmatprep.subr.mxu0 0.0
      %455 = vmatpush1.msra.mxu0 0.0
      %456 = vmatprep.subr.mxu0 0.0
      %457 = vmatpush1.msra.mxu0 0.0
      %458 = vmatprep.subr.mxu0 0.0
      %459 = vmatpush1.msra.mxu0 0.0
      %460 = vmatprep.subr.mxu0 0.0
      %461 = vmatpush1.msra.mxu0 0.0
      %462 = vmatprep.subr.mxu0 0.0
      %463 = vmatpush1.msra.mxu0 0.0
      %464 = vmatprep.subr.mxu0 0.0
      %465 = vmatpush1.msra.mxu0 0.0
      %466 = vmatprep.subr.mxu0 0.0
      %467 = vmatpush1.msra.mxu0 0.0
      %468 = vmatprep.subr.mxu0 0.0
      %469 = vmatpush1.msra.mxu0 0.0
      %470 = vmatprep.subr.mxu0 0.0
      %471 = vmatpush1.msra.mxu0 0.0
      %472 = vmatprep.subr.mxu0 0.0
      %473 = vmatpush1.msra.mxu0 0.0
      %474 = vmatprep.subr.mxu0 0.0
      %475 = vmatpush1.msra.mxu0 0.0
      %476 = vmatprep.subr.mxu0 0.0
      %477 = vmatpush1.msra.mxu0 0.0
      %478 = vmatprep.subr.mxu0 0.0
      %479 = vmatpush1.msra.mxu0 0.0
      %480 = vmatprep.subr.mxu0 0.0
      %481 = vmatpush1.msra.mxu0 0.0
      %482 = vmatprep.subr.mxu0 0.0
      %483 = vmatpush1.msra.mxu0 0.0
      %484 = vmatprep.subr.mxu0 0.0
      %485 = vmatpush1.msra.mxu0 0.0
      %486 = vmatprep.subr.mxu0 0.0
      %487 = vmatpush1.msra.mxu0 0.0
      %488 = vmatprep.subr.mxu0 0.0
      %489 = vmatpush1.msra.mxu0 0.0
      %490 = vmatprep.subr.mxu0 0.0
      %491 = vmatpush1.msra.mxu0 0.0
      %492 = vmatprep.subr.mxu0 0.0
      %493 = vmatpush1.msra.mxu0 0.0
      %494 = vmatprep.subr.mxu0 0.0
      %495 = vmatpush1.msra.mxu0 0.0
      %496 = vmatprep.subr.mxu0 0.0
      %497 = vmatpush1.msra.mxu0 0.0
      %498 = vmatprep.subr.mxu0 0.0
      %499 = vmatpush1.msra.mxu0 0.0
      %500 = vmatprep.subr.mxu0 0.0
      %501 = vmatpush1.msra.mxu0 0.0
      %502 = vmatprep.subr.mxu0 0.0
      %503 = vmatpush1.msra.mxu0 0.0
      %504 = vmatprep.subr.mxu0 0.0
      %505 = vmatpush1.msra.mxu0 0.0
      %506 = vmatprep.subr.mxu0 0.0
      %507 = vmatpush1.msra.mxu0 0.0
      %508 = vmatprep.subr.mxu0 0.0
      %509 = vmatpush1.msra.mxu0 0.0
      %510 = vmatprep.mubr.f32.mxu0 0.0
      %511 = vmatmul.mubr.f32.gmra.mrb[0].mxu0 %v444
      %v512 = vpop.f32.mrb[0].mxu0
      %v513 = vadd.f32 0.0, %v512
      %v514 = vpop.f32.mrb[0].mxu0
      %v515 = vadd.f32 0.0, %v514
      %516 = vdwg.mxu0
      %519 = vrot.lane.b32.xlu0 %v437, 127
      %v520 = vpop.permute.xlu0 %519
      %521 = vrot.lane.b32.xlu0 %v439, 127
      %v522 = vpop.permute.xlu0 %521
      %vm523 = vcmask 1039360
      %v524 = vsel %vm523, %v520, %v522
      %v527 = vadd.f32 %v361, %v524
      %v528 = vadd.f32 %v363, %v522
      %531 = vrot.lane.b32.xlu0 %v513, 126
      %v532 = vpop.permute.xlu0 %531
      %533 = vrot.lane.b32.xlu0 %v515, 126
      %v534 = vpop.permute.xlu0 %533
      %vm535 = vcmask 1031168
      %v536 = vsel %vm535, %v532, %v534
      %v539 = vadd.f32 %v527, %v536
      %v540 = vadd.f32 %v528, %v534
      %v541 = vmax.f32 %v539, 0.0
      %v542 = vmax.f32 %v540, 0.0
      %v543 = vld [vmem:[%s241] sm:$0x3]
      %v545 = vlaneseq
      %v546 = vshrl.u32 %v545, 7
      %v547 = vsub.s32 0, %v546
      %v548 = vrot.slane %v543, %v547
      %v549 = vlaneseq
      %v550 = vshrl.u32 %v549, 7
      %v551 = vsub.s32 1, %v550
      %v552 = vrot.slane %v543, %v551
      %v555 = vmul.f32 %v541, %v548
      %v556 = vmul.f32 %v542, %v552
      %559 = vrot.lane.b32.xlu0 %v555, 110
      %v560 = vpop.permute.xlu0 %559
      %561 = vrot.lane.b32.xlu0 %v556, 110
      %v562 = vpop.permute.xlu0 %561
      %v563 = vsel %vm259, %v560, %v562
      %566 = vrot.lane.b32.xlu0 %v555, 92
      %v567 = vpop.permute.xlu0 %566
      %568 = vrot.lane.b32.xlu0 %v556, 92
      %v569 = vpop.permute.xlu0 %568
      %v570 = vsel %vm265, %v567, %v569
      %v573 = vld [vmem:[%s2] sm:$0xff]
      %v575 = vsel %vm290, %v573, 0
      %577 = vmatprep.subr.mxu0 %v556
      %578 = vmatpush1.msra.mxu0 %v555
      %579 = vmatprep.subr.mxu0 %v562
      %580 = vmatpush1.msra.mxu0 %v563
      %581 = vmatprep.subr.mxu0 %v569
      %582 = vmatpush1.msra.mxu0 %v570
      %583 = vmatprep.subr.mxu0 0.0
      %584 = vmatpush1.msra.mxu0 0.0
      %585 = vmatprep.subr.mxu0 0.0
      %586 = vmatpush1.msra.mxu0 0.0
      %587 = vmatprep.subr.mxu0 0.0
      %588 = vmatpush1.msra.mxu0 0.0
      %589 = vmatprep.subr.mxu0 0.0
      %590 = vmatpush1.msra.mxu0 0.0
      %591 = vmatprep.subr.mxu0 0.0
      %592 = vmatpush1.msra.mxu0 0.0
      %593 = vmatprep.subr.mxu0 0.0
      %594 = vmatpush1.msra.mxu0 0.0
      %595 = vmatprep.subr.mxu0 0.0
      %596 = vmatpush1.msra.mxu0 0.0
      %597 = vmatprep.subr.mxu0 0.0
      %598 = vmatpush1.msra.mxu0 0.0
      %599 = vmatprep.subr.mxu0 0.0
      %600 = vmatpush1.msra.mxu0 0.0
      %601 = vmatprep.subr.mxu0 0.0
      %602 = vmatpush1.msra.mxu0 0.0
      %603 = vmatprep.subr.mxu0 0.0
      %604 = vmatpush1.msra.mxu0 0.0
      %605 = vmatprep.subr.mxu0 0.0
      %606 = vmatpush1.msra.mxu0 0.0
      %607 = vmatprep.subr.mxu0 0.0
      %608 = vmatpush1.msra.mxu0 0.0
      %609 = vmatprep.subr.mxu0 0.0
      %610 = vmatpush1.msra.mxu0 0.0
      %611 = vmatprep.subr.mxu0 0.0
      %612 = vmatpush1.msra.mxu0 0.0
      %613 = vmatprep.subr.mxu0 0.0
      %614 = vmatpush1.msra.mxu0 0.0
      %615 = vmatprep.subr.mxu0 0.0
      %616 = vmatpush1.msra.mxu0 0.0
      %617 = vmatprep.subr.mxu0 0.0
      %618 = vmatpush1.msra.mxu0 0.0
      %619 = vmatprep.subr.mxu0 0.0
      %620 = vmatpush1.msra.mxu0 0.0
      %621 = vmatprep.subr.mxu0 0.0
      %622 = vmatpush1.msra.mxu0 0.0
      %623 = vmatprep.subr.mxu0 0.0
      %624 = vmatpush1.msra.mxu0 0.0
      %625 = vmatprep.subr.mxu0 0.0
      %626 = vmatpush1.msra.mxu0 0.0
      %627 = vmatprep.subr.mxu0 0.0
      %628 = vmatpush1.msra.mxu0 0.0
      %629 = vmatprep.subr.mxu0 0.0
      %630 = vmatpush1.msra.mxu0 0.0
      %631 = vmatprep.subr.mxu0 0.0
      %632 = vmatpush1.msra.mxu0 0.0
      %633 = vmatprep.subr.mxu0 0.0
      %634 = vmatpush1.msra.mxu0 0.0
      %635 = vmatprep.subr.mxu0 0.0
      %636 = vmatpush1.msra.mxu0 0.0
      %637 = vmatprep.subr.mxu0 0.0
      %638 = vmatpush1.msra.mxu0 0.0
      %639 = vmatprep.subr.mxu0 0.0
      %640 = vmatpush1.msra.mxu0 0.0
      %641 = vmatprep.mubr.f32.mxu0 0.0
      %642 = vmatmul.mubr.f32.gmra.mrb[0].mxu0 %v575
      %v643 = vpop.f32.mrb[0].mxu0
      %v644 = vadd.f32 0.0, %v643
      %v645 = vpop.f32.mrb[0].mxu0
      %v646 = vadd.f32 0.0, %v645
      %647 = vdwg.mxu0
      %s648 = scalar_lea.vmem %s2, 8
      %v649 = vld [vmem:[%s648] sm:$0xff]
      %v651 = vsel %vm290, %v649, 0
      %653 = vmatprep.subr.mxu0 %v556
      %654 = vmatpush1.msra.mxu0 %v555
      %655 = vmatprep.subr.mxu0 %v562
      %656 = vmatpush1.msra.mxu0 %v563
      %657 = vmatprep.subr.mxu0 %v569
      %658 = vmatpush1.msra.mxu0 %v570
      %659 = vmatprep.subr.mxu0 0.0
      %660 = vmatpush1.msra.mxu0 0.0
      %661 = vmatprep.subr.mxu0 0.0
      %662 = vmatpush1.msra.mxu0 0.0
      %663 = vmatprep.subr.mxu0 0.0
      %664 = vmatpush1.msra.mxu0 0.0
      %665 = vmatprep.subr.mxu0 0.0
      %666 = vmatpush1.msra.mxu0 0.0
      %667 = vmatprep.subr.mxu0 0.0
      %668 = vmatpush1.msra.mxu0 0.0
      %669 = vmatprep.subr.mxu0 0.0
      %670 = vmatpush1.msra.mxu0 0.0
      %671 = vmatprep.subr.mxu0 0.0
      %672 = vmatpush1.msra.mxu0 0.0
      %673 = vmatprep.subr.mxu0 0.0
      %674 = vmatpush1.msra.mxu0 0.0
      %675 = vmatprep.subr.mxu0 0.0
      %676 = vmatpush1.msra.mxu0 0.0
      %677 = vmatprep.subr.mxu0 0.0
      %678 = vmatpush1.msra.mxu0 0.0
      %679 = vmatprep.subr.mxu0 0.0
      %680 = vmatpush1.msra.mxu0 0.0
      %681 = vmatprep.subr.mxu0 0.0
      %682 = vmatpush1.msra.mxu0 0.0
      %683 = vmatprep.subr.mxu0 0.0
      %684 = vmatpush1.msra.mxu0 0.0
      %685 = vmatprep.subr.mxu0 0.0
      %686 = vmatpush1.msra.mxu0 0.0
      %687 = vmatprep.subr.mxu0 0.0
      %688 = vmatpush1.msra.mxu0 0.0
      %689 = vmatprep.subr.mxu0 0.0
      %690 = vmatpush1.msra.mxu0 0.0
      %691 = vmatprep.subr.mxu0 0.0
      %692 = vmatpush1.msra.mxu0 0.0
      %693 = vmatprep.subr.mxu0 0.0
      %694 = vmatpush1.msra.mxu0 0.0
      %695 = vmatprep.subr.mxu0 0.0
      %696 = vmatpush1.msra.mxu0 0.0
      %697 = vmatprep.subr.mxu0 0.0
      %698 = vmatpush1.msra.mxu0 0.0
      %699 = vmatprep.subr.mxu0 0.0
      %700 = vmatpush1.msra.mxu0 0.0
      %701 = vmatprep.subr.mxu0 0.0
      %702 = vmatpush1.msra.mxu0 0.0
      %703 = vmatprep.subr.mxu0 0.0
      %704 = vmatpush1.msra.mxu0 0.0
      %705 = vmatprep.subr.mxu0 0.0
      %706 = vmatpush1.msra.mxu0 0.0
      %707 = vmatprep.subr.mxu0 0.0
      %708 = vmatpush1.msra.mxu0 0.0
      %709 = vmatprep.subr.mxu0 0.0
      %710 = vmatpush1.msra.mxu0 0.0
      %711 = vmatprep.subr.mxu0 0.0
      %712 = vmatpush1.msra.mxu0 0.0
      %713 = vmatprep.subr.mxu0 0.0
      %714 = vmatpush1.msra.mxu0 0.0
      %715 = vmatprep.subr.mxu0 0.0
      %716 = vmatpush1.msra.mxu0 0.0
      %717 = vmatprep.mubr.f32.mxu0 0.0
      %718 = vmatmul.mubr.f32.gmra.mrb[0].mxu0 %v651
      %v719 = vpop.f32.mrb[0].mxu0
      %v720 = vadd.f32 0.0, %v719
      %v721 = vpop.f32.mrb[0].mxu0
      %v722 = vadd.f32 0.0, %v721
      %723 = vdwg.mxu0
      %s724 = scalar_lea.vmem %s2, 16
      %v725 = vld [vmem:[%s724] sm:$0xff]
      %v727 = vsel %vm290, %v725, 0
      %729 = vmatprep.subr.mxu0 %v556
      %730 = vmatpush1.msra.mxu0 %v555
      %731 = vmatprep.subr.mxu0 %v562
      %732 = vmatpush1.msra.mxu0 %v563
      %733 = vmatprep.subr.mxu0 %v569
      %734 = vmatpush1.msra.mxu0 %v570
      %735 = vmatprep.subr.mxu0 0.0
      %736 = vmatpush1.msra.mxu0 0.0
      %737 = vmatprep.subr.mxu0 0.0
      %738 = vmatpush1.msra.mxu0 0.0
      %739 = vmatprep.subr.mxu0 0.0
      %740 = vmatpush1.msra.mxu0 0.0
      %741 = vmatprep.subr.mxu0 0.0
      %742 = vmatpush1.msra.mxu0 0.0
      %743 = vmatprep.subr.mxu0 0.0
      %744 = vmatpush1.msra.mxu0 0.0
      %745 = vmatprep.subr.mxu0 0.0
      %746 = vmatpush1.msra.mxu0 0.0
      %747 = vmatprep.subr.mxu0 0.0
      %748 = vmatpush1.msra.mxu0 0.0
      %749 = vmatprep.subr.mxu0 0.0
      %750 = vmatpush1.msra.mxu0 0.0
      %751 = vmatprep.subr.mxu0 0.0
      %752 = vmatpush1.msra.mxu0 0.0
      %753 = vmatprep.subr.mxu0 0.0
      %754 = vmatpush1.msra.mxu0 0.0
      %755 = vmatprep.subr.mxu0 0.0
      %756 = vmatpush1.msra.mxu0 0.0
      %757 = vmatprep.subr.mxu0 0.0
      %758 = vmatpush1.msra.mxu0 0.0
      %759 = vmatprep.subr.mxu0 0.0
      %760 = vmatpush1.msra.mxu0 0.0
      %761 = vmatprep.subr.mxu0 0.0
      %762 = vmatpush1.msra.mxu0 0.0
      %763 = vmatprep.subr.mxu0 0.0
      %764 = vmatpush1.msra.mxu0 0.0
      %765 = vmatprep.subr.mxu0 0.0
      %766 = vmatpush1.msra.mxu0 0.0
      %767 = vmatprep.subr.mxu0 0.0
      %768 = vmatpush1.msra.mxu0 0.0
      %769 = vmatprep.subr.mxu0 0.0
      %770 = vmatpush1.msra.mxu0 0.0
      %771 = vmatprep.subr.mxu0 0.0
      %772 = vmatpush1.msra.mxu0 0.0
      %773 = vmatprep.subr.mxu0 0.0
      %774 = vmatpush1.msra.mxu0 0.0
      %775 = vmatprep.subr.mxu0 0.0
      %776 = vmatpush1.msra.mxu0 0.0
      %777 = vmatprep.subr.mxu0 0.0
      %778 = vmatpush1.msra.mxu0 0.0
      %779 = vmatprep.subr.mxu0 0.0
      %780 = vmatpush1.msra.mxu0 0.0
      %781 = vmatprep.subr.mxu0 0.0
      %782 = vmatpush1.msra.mxu0 0.0
      %783 = vmatprep.subr.mxu0 0.0
      %784 = vmatpush1.msra.mxu0 0.0
      %785 = vmatprep.subr.mxu0 0.0
      %786 = vmatpush1.msra.mxu0 0.0
      %787 = vmatprep.subr.mxu0 0.0
      %788 = vmatpush1.msra.mxu0 0.0
      %789 = vmatprep.subr.mxu0 0.0
      %790 = vmatpush1.msra.mxu0 0.0
      %791 = vmatprep.subr.mxu0 0.0
      %792 = vmatpush1.msra.mxu0 0.0
      %793 = vmatprep.mubr.f32.mxu0 0.0
      %794 = vmatmul.mubr.f32.gmra.mrb[0].mxu0 %v727
      %v795 = vpop.f32.mrb[0].mxu0
      %v796 = vadd.f32 0.0, %v795
      %v797 = vpop.f32.mrb[0].mxu0
      %v798 = vadd.f32 0.0, %v797
      %799 = vdwg.mxu0
      %802 = vrot.lane.b32.xlu0 %v720, 127
      %v803 = vpop.permute.xlu0 %802
      %804 = vrot.lane.b32.xlu0 %v722, 127
      %v805 = vpop.permute.xlu0 %804
      %v806 = vsel %vm523, %v803, %v805
      %v809 = vadd.f32 %v644, %v806
      %v810 = vadd.f32 %v646, %v805
      %813 = vrot.lane.b32.xlu0 %v796, 126
      %v814 = vpop.permute.xlu0 %813
      %815 = vrot.lane.b32.xlu0 %v798, 126
      %v816 = vpop.permute.xlu0 %815
      %v817 = vsel %vm535, %v814, %v816
      %v820 = vadd.f32 %v809, %v817
      %v821 = vadd.f32 %v810, %v816
      %v822 = vmax.f32 %v820, 0.0
      %v823 = vmax.f32 %v821, 0.0
      %824 = vst [vmem:[%s250] sm:$0xff] %v822
      %vm825 = vcmask 130048
      %826 = vst.msk [vmem:[%s250 + $0x8] sm:$0xff] %vm825, %v823
      %p827 = scmp.lt.s32.totalorder %s19, 1
      %s828 = scalar_select %p827, %s19, 1
      %p829 = scmp.lt.s32.totalorder %s20, 1
      %s830 = scalar_select %p829, %s20, 1
      %s831 = smul.addr %s830, 2
      %s832 = smul.addr %s828, 4
      %s833 = sadd.s32 %s831, %s832
      %s834 = smul.addr %s833, 8
      %s835 = scalar_lea.vmem %s4, %s834
      // Predicated region
      $region37: #{double_conv.1} parent=35 // pred_check
        %p836 = pneg %p143
      $region38: #{double_conv.1} parent=35 // pred_check_branch
        %838 = sbr.rel (%p836) target = $region40
      $region39: #{double_conv.1} parent=35 // pred_region
        _
      $region40: #{double_conv.1} parent=35 // pred_fallthru
        _
    $region36: #{double_conv.1} parent=5 // pred_fallthru
      _
    %p839 = scmp.le.s32.totalorder 2, %s10
    // Predicated region
    $region41: #{double_conv.1} parent=5 // pred_check
      %p840 = pneg %p839
    $region42: #{double_conv.1} parent=5 // pred_check_branch
      %842 = sbr.rel (%p840) target = $region44
    $region43: #{double_conv.1} parent=5 // pred_region
      %s843 = ssub.s32 %s10, 2
      // Predicated region
      $region45: #{double_conv.1} parent=43 // pred_check
        %p844 = pneg %p149
      $region46: #{double_conv.1} parent=43 // pred_check_branch
        %846 = sbr.rel (%p844) target = $region48
      $region47: #{double_conv.1} parent=43 // pred_region
        %p847 = scmp.lt.s32.totalorder %s21, 1
        %s848 = scalar_select %p847, %s21, 1
        %p849 = scmp.lt.s32.totalorder %s22, 1
        %s850 = scalar_select %p849, %s22, 1
        %s851 = smul.addr %s850, 2
        %s852 = smul.addr %s848, 4
        %s853 = sadd.s32 %s851, %s852
        %s854 = smul.addr %s853, 8
        %s855 = scalar_lea.vmem %s4, %s854
      $region48: #{double_conv.1} parent=43 // pred_fallthru
        _
    $region44: #{double_conv.1} parent=5 // pred_fallthru
      _
  $region6: #{double_conv.1} parent=0 // loop_footer
    %s14 = sadd.s32 1, %s10
  $region7: #{double_conv.1} parent=0 // loop_footer_branch
    %9 = sbr.rel target = $region3
  $region8: #{double_conv.1} parent=0 // loop_exit
    _

</llo_original>
